<compile_context>
chip_gen: v6e
topology: v6e:2x2x1
jax: 0.10.0
libtpu: 0.0.40
codegen_flags: <defaults>
</compile_context>

<pallas_src>
import jax
import jax.numpy as jnp
from jax import lax
from jax.experimental import pallas as pl
from jax.experimental.pallas import tpu as pltpu


def _termination_kernel(x_ref, w_ref, b_ref, o_ref):
    # x_ref: [TILE, D] (x.dtype)  natural row-major block of flattened rows
    # w_ref: [1, D]    (x.dtype)  VMEM-resident across the whole grid
    # b_ref: [1]       (f32)      scalar bias in SMEM
    # o_ref: [1, TILE] (x.dtype)  lane-dense output slab
    #
    # Linear(D -> 1): contract the D axes of [1, D] and [TILE, D] -> [1, TILE].
    # The K-reduction runs on the MXU ("vector extended" slot, idle in this
    # DMA-bound kernel) and the result is already lane-dense.
    logits = lax.dot_general(
        w_ref[...], x_ref[...],
        dimension_numbers=(((1,), (1,)), ((), ())),
        preferred_element_type=jnp.float32,
    ) + b_ref[0]                                   # [1, TILE] f32
    o_ref[...] = jax.nn.sigmoid(logits).astype(o_ref.dtype)


def _round_up(a, b):
    return ((a + b - 1) // b) * b


def termination_probability(x, weight, bias, *, target_block_bytes=2 << 20):
    """x: [B, M, D], weight: [1, D], bias: [1]  ->  [B, M] in x.dtype."""
    B, M, D = x.shape
    N = B * M
    x2 = x.reshape(N, D)                       # free reshape; no HBM transpose/pad
    itemsize = x.dtype.itemsize

    # Rows per grid step: ~target_block_bytes of input per block (multiple of
    # 128 lanes), but keep >= ~8 grid steps when N is large so both v7x TCs and
    # the double-buffer pipeline stay busy.
    tile = max(128, (target_block_bytes // max(1, D * itemsize)) // 128 * 128)
    tile = min(tile, max(128, _round_up((N + 7) // 8, 128)))
    if tile >= N:
        tile = N          # single block == full array extents (alignment waived)
    num_tiles = pl.cdiv(N, tile)
    n_pad = num_tiles * tile                   # pad only the tiny output shape

    w2 = weight.reshape(1, D).astype(x.dtype)  # MXU operand, f32 accumulation
    b1 = bias.reshape(1).astype(jnp.float32)

    out = pl.pallas_call(
        _termination_kernel,
        out_shape=jax.ShapeDtypeStruct((1, n_pad), x.dtype),
        grid=(num_tiles,),
        in_specs=[
            # x tile: new (tile, D) row slab each step, auto double-buffered.
            pl.BlockSpec((tile, D), lambda i: (i, 0)),
            # weight: constant block index -> stays VMEM-resident.
            pl.BlockSpec((1, D), lambda i: (0, 0)),
            # scalar bias on the scalar path.
            pl.BlockSpec(memory_space=pltpu.MemorySpace.SMEM),
        ],
        out_specs=pl.BlockSpec((1, tile), lambda i: (0, i)),
        compiler_params=pltpu.CompilerParams(
            dimension_semantics=("parallel",)),   # megacore split on 2-TC chips
        cost_estimate=pl.CostEstimate(
            flops=2 * N * D,
            transcendentals=N,
            bytes_accessed=N * D * itemsize + n_pad * itemsize + D * itemsize,
        ),
    )(x2, w2, b1)

    probs = out[0, :N].reshape(B, M)           # already x.dtype; tail sliced off
    # cat([probs[:, :-1], ones], dim=1): force the last primitive's prob to 1.
    return probs.at[:, -1].set(jnp.ones((), x.dtype))


def _reference(x, weight, bias):
    logits = jnp.einsum("bmd,d->bm", x, weight.reshape(-1)) + bias.reshape(())
    p = jax.nn.sigmoid(logits)
    ones = jnp.ones((x.shape[0], 1), x.dtype)
    return jnp.concatenate([p[:, :-1], ones], axis=1)


if __name__ == "__main__":
    key = jax.random.PRNGKey(0)
    B, M, D = 2, 8, 32   # batch, n_primitives, feature dims (fe.feature_shape)

    kx, kw, kb = jax.random.split(key, 3)
    x = jax.random.normal(kx, (B, M, D), dtype=jnp.float32)

    # Deterministic nn.Linear(D, 1)-style init: U(-1/sqrt(D), 1/sqrt(D))
    bound = 1.0 / jnp.sqrt(jnp.float32(D))
    weight = jax.random.uniform(kw, (1, D), minval=-bound, maxval=bound,
                                dtype=jnp.float32)
    bias = jax.random.uniform(kb, (1,), minval=-bound, maxval=bound,
                              dtype=jnp.float32)

    out = termination_probability(x, weight, bias)
    out = jax.block_until_ready(out)

    ref = _reference(x, weight, bias)
    assert out.shape == (B, M)
    # Tolerance accounts for the TPU MXU's reduced-precision f32 (bf16-pass)
    # contraction path; the kernel is otherwise exact.
    assert jnp.allclose(out, ref, atol=5e-3, rtol=5e-3), "mismatch vs reference"
    assert jnp.allclose(out[:, -1], 1.0), "last column must be 1.0"

    print("KERNEL_OK")
</pallas_src>

<mosaic_0001>
module attributes {stable_mosaic.version = 11 : i64} {
  func.func @_termination_kernel(%arg0: i32, %arg1: memref<16x32xf32, #tpu.memory_space<vmem>>, %arg2: memref<1x32xf32, #tpu.memory_space<vmem>>, %arg3: memref<1xf32, #tpu.memory_space<smem>>, %arg4: memref<1x16xf32, #tpu.memory_space<vmem>>) attributes {dimension_semantics = [#tpu.dimension_semantics<parallel>], iteration_bounds = array<i64: 1>, scalar_prefetch = 0 : i64, scratch_operands = 0 : i64, tpu.core_type = #tpu.core_type<tc>, window_params = [{transform_indices = @transform_0, window_bounds = array<i64: 16, 32>}, {pipeline_mode = #tpu.pipeline_mode<synchronous>, transform_indices = @transform_1, window_bounds = array<i64: 1, 32>}, {transform_indices = @transform_2, window_bounds = array<i64: 1>}, {transform_indices = @transform_3, window_bounds = array<i64: 1, 16>}]} {
    %c0 = arith.constant 0 : index
    %c0_0 = arith.constant 0 : index
    %0 = vector.load %arg2[%c0, %c0_0] : memref<1x32xf32, #tpu.memory_space<vmem>>, vector<1x32xf32>
    %c0_1 = arith.constant 0 : index
    %c0_2 = arith.constant 0 : index
    %1 = vector.load %arg1[%c0_1, %c0_2] : memref<16x32xf32, #tpu.memory_space<vmem>>, vector<16x32xf32>
    %cst = arith.constant dense<0.000000e+00> : vector<1x16xf32>
    %2 = tpu.matmul %0, %1, %cst {dimension_numbers = #tpu.dot_dimension_numbers<[1], [1], [0], [0], [0, 0, 1, 0], [], []>} : vector<1x32xf32>, vector<16x32xf32>, vector<1x16xf32> -> vector<1x16xf32>
    %c0_3 = arith.constant 0 : index
    %3 = memref.load %arg3[%c0_3] : memref<1xf32, #tpu.memory_space<smem>>
    %4 = vector.broadcast %3 : f32 to vector<1x16xf32>
    %5 = arith.addf %2, %4 : vector<1x16xf32>
    %6 = arith.negf %5 : vector<1x16xf32>
    %7 = math.exp %6 : vector<1x16xf32>
    %cst_4 = arith.constant 1.000000e+00 : f32
    %8 = vector.broadcast %cst_4 : f32 to vector<1x16xf32>
    %9 = arith.addf %8, %7 : vector<1x16xf32>
    %10 = arith.divf %8, %9 : vector<1x16xf32>
    %c0_5 = arith.constant 0 : index
    %c0_6 = arith.constant 0 : index
    %11 = vector.load %arg4[%c0_5, %c0_6] : memref<1x16xf32, #tpu.memory_space<vmem>>, vector<1x16xf32>
    tpu.vector_store %arg4[%c0_5, %c0_6], %10 {strides = array<i32>} : memref<1x16xf32, #tpu.memory_space<vmem>>, vector<1x16xf32>,
    return
  }
  func.func @transform_0(%arg0: i32) -> (i32, i32) {
    %c0_i32 = arith.constant 0 : i32
    %c0_i32_0 = arith.constant 0 : i32
    return %arg0, %c0_i32 : i32, i32
  }
  func.func @transform_1(%arg0: i32) -> (i32, i32) {
    %c0_i32 = arith.constant 0 : i32
    %c0_i32_0 = arith.constant 0 : i32
    %c0_i32_1 = arith.constant 0 : i32
    return %c0_i32, %c0_i32_0 : i32, i32
  }
  func.func @transform_2(%arg0: i32) -> i32 {
    %c0_i32 = arith.constant 0 : i32
    %c0_i32_0 = arith.constant 0 : i32
    return %c0_i32 : i32
  }
  func.func @transform_3(%arg0: i32) -> (i32, i32) {
    %c0_i32 = arith.constant 0 : i32
    %c0_i32_0 = arith.constant 0 : i32
    return %c0_i32, %arg0 : i32, i32
  }
}

</mosaic_0001>

<llo_original>
// kernel: tpu_custom_call.1
$region0: #{tpu_custom_call.1}
  #allocation0 [shape = 'u32[]', space=smem, size = 0x4, offset = 0x4, fixed_abs, tag = 'smem constant byte address 0x4 - core index']
  #allocation1 [shape = 'u32[144,128]{1,0:T(1,128)}', space=vmem, size = 0x12000, scoped, tag = 'internal scratch']
  #allocation2 [shape = 'f32[1]{0:T(128)S(6)}', space=smem, size = 0x200, scoped, tag = 'scoped memory for tpu_custom_call.1']
  %s0 = inlined_call_operand.hbm [shape: f32[16,32], index: 0, kind: input, shape index: {}]
  %s1 = inlined_call_operand.vmem [shape: f32[1,32], index: 1, kind: input, shape index: {}]
  %s2 = inlined_call_operand.<no memory space> [shape: f32[1], index: 2, kind: input, shape index: {}]
  %s3 = inlined_call_operand.hbm [shape: f32[1,16], index: 3, kind: output, shape index: {}]
  %s4 = sld [smem:[#allocation0]]
  $region26: #{tpu_custom_call.1} parent=0
    _
  %s6 = ssub.s32 1, %s4
  %s7 = scalar_select 0, %s6, %s4
  %8 = sst [smem:[#allocation2]] %s2
  $region1: #{tpu_custom_call.1} parent=0
    #allocation3 [shape = 'u8[8192]{0}', space=vmem, size = 0x2000, scoped, tag = 'input window, operand 0, single buffered']
    #allocation4 [shape = 's32[1]{0}', space=sflag, size = 0x4, scoped, tag = 'scoped memory for tpu_custom_call.1']
    #allocation5 [shape = 's32[1]{0}', space=sflag, size = 0x4, scoped, tag = 'scoped memory for tpu_custom_call.1']
    #allocation6 [shape = 'u8[512]{0}', space=vmem, size = 0x400, scoped, tag = 'output window, operand 0, single buffered']
    %9 = vsyncpa [#allocation4], 0
    %10 = vsyncpa [#allocation5], 0
    // Predicated region
    $region2: #{tpu_custom_call.1} parent=1 // pred_check
      _
    $region3: #{tpu_custom_call.1} parent=1 // pred_check_branch
      %12 = sbr.rel (0) target = $region5
    $region4: #{tpu_custom_call.1} parent=1 // pred_region
      %s14 = ssub.s32 256, 256
      %15 = vsyncadd [#allocation4], %s14
      %s16 = sshll.u32 [#allocation3], 4
      %s17 = int_to_ptr.vmem [resolvable:$true] %s16
      %22 = dma.hbm_to_vmem [thread:$0]  %s0, 256, %s17, [#allocation4], 128, 128, 8
    $region5: #{tpu_custom_call.1} parent=1 // pred_fallthru
      _
    // Predicated region
    $region6: #{tpu_custom_call.1} parent=1 // pred_check
      _
    $region7: #{tpu_custom_call.1} parent=1 // pred_check_branch
      %24 = sbr.rel (0) target = $region9
    $region8: #{tpu_custom_call.1} parent=1 // pred_region
      _
    $region9: #{tpu_custom_call.1} parent=1 // pred_fallthru
      _
    // Predicated region
    $region10: #{tpu_custom_call.1} parent=1 // pred_check
      _
    $region11: #{tpu_custom_call.1} parent=1 // pred_check_branch
      %26 = sbr.rel (0) target = $region13
    $region12: #{tpu_custom_call.1} parent=1 // pred_region
      _
    $region13: #{tpu_custom_call.1} parent=1 // pred_fallthru
      _
    // Predicated region
    $region14: #{tpu_custom_call.1} parent=1 // pred_check
      _
    $region15: #{tpu_custom_call.1} parent=1 // pred_check_branch
      %28 = sbr.rel (0) target = $region17
    $region16: #{tpu_custom_call.1} parent=1 // pred_region
      %29 = dma.done [#allocation4], 256
    $region17: #{tpu_custom_call.1} parent=1 // pred_fallthru
      _
    %v30 = vld [vmem:[%s1] sm:$0x1]
    %v31 = vld [vmem:[#allocation3] sm:$0xff]
    %v32 = vld [vmem:[#allocation3 + $0x8] sm:$0xff]
    %s33 = sld [smem:[#allocation2]]
    %v34 = vstv %s33
    %vm35 = vcmask 261120
    %v37 = vsel %vm35, %v30, 0
    %v40 = vsel %vm35, %v31, 0
    %v43 = vsel %vm35, %v32, 0
    %45 = vmatprep.subr.mxu0 0.0
    %46 = vmatpush1.xpose.msra.mxu0 0.0
    %47 = vmatprep.subr.mxu0 0.0
    %48 = vmatpush1.xpose.msra.mxu0 0.0
    %49 = vmatprep.subr.mxu0 0.0
    %50 = vmatpush1.xpose.msra.mxu0 0.0
    %51 = vmatprep.subr.mxu0 0.0
    %52 = vmatpush1.xpose.msra.mxu0 0.0
    %53 = vmatprep.subr.mxu0 0.0
    %54 = vmatpush1.xpose.msra.mxu0 0.0
    %55 = vmatprep.subr.mxu0 0.0
    %56 = vmatpush1.xpose.msra.mxu0 0.0
    %57 = vmatprep.subr.mxu0 0.0
    %58 = vmatpush1.xpose.msra.mxu0 0.0
    %59 = vmatprep.subr.mxu0 0.0
    %60 = vmatpush1.xpose.msra.mxu0 0.0
    %61 = vmatprep.subr.mxu0 0.0
    %62 = vmatpush1.xpose.msra.mxu0 0.0
    %63 = vmatprep.subr.mxu0 0.0
    %64 = vmatpush1.xpose.msra.mxu0 0.0
    %65 = vmatprep.subr.mxu0 0.0
    %66 = vmatpush1.xpose.msra.mxu0 0.0
    %67 = vmatprep.subr.mxu0 0.0
    %68 = vmatpush1.xpose.msra.mxu0 0.0
    %69 = vmatprep.subr.mxu0 0.0
    %70 = vmatpush1.xpose.msra.mxu0 0.0
    %71 = vmatprep.subr.mxu0 0.0
    %72 = vmatpush1.xpose.msra.mxu0 0.0
    %73 = vmatprep.subr.mxu0 0.0
    %74 = vmatpush1.xpose.msra.mxu0 %v43
    %75 = vmatprep.subr.mxu0 0.0
    %76 = vmatpush1.xpose.msra.mxu0 %v40
    %77 = vmatprep.subr.mxu0 0.0
    %78 = vmatpush2.xpose.msra.mxu0 0.0
    %79 = vmatprep.subr.mxu0 0.0
    %80 = vmatpush2.xpose.msra.mxu0 0.0
    %81 = vmatprep.subr.mxu0 0.0
    %82 = vmatpush2.xpose.msra.mxu0 0.0
    %83 = vmatprep.subr.mxu0 0.0
    %84 = vmatpush2.xpose.msra.mxu0 0.0
    %85 = vmatprep.subr.mxu0 0.0
    %86 = vmatpush2.xpose.msra.mxu0 0.0
    %87 = vmatprep.subr.mxu0 0.0
    %88 = vmatpush2.xpose.msra.mxu0 0.0
    %89 = vmatprep.subr.mxu0 0.0
    %90 = vmatpush2.xpose.msra.mxu0 0.0
    %91 = vmatprep.subr.mxu0 0.0
    %92 = vmatpush2.xpose.msra.mxu0 0.0
    %93 = vmatprep.subr.mxu0 0.0
    %94 = vmatpush2.xpose.msra.mxu0 0.0
    %95 = vmatprep.subr.mxu0 0.0
    %96 = vmatpush2.xpose.msra.mxu0 0.0
    %97 = vmatprep.subr.mxu0 0.0
    %98 = vmatpush2.xpose.msra.mxu0 0.0
    %99 = vmatprep.subr.mxu0 0.0
    %100 = vmatpush2.xpose.msra.mxu0 0.0
    %101 = vmatprep.subr.mxu0 0.0
    %102 = vmatpush2.xpose.msra.mxu0 0.0
    %103 = vmatprep.subr.mxu0 0.0
    %104 = vmatpush2.xpose.msra.mxu0 0.0
    %105 = vmatprep.subr.mxu0 0.0
    %106 = vmatpush2.xpose.msra.mxu0 0.0
    %107 = vmatprep.subr.mxu0 0.0
    %108 = vmatpush2.xpose.msra.mxu0 0.0
    %109 = vmatprep.mubr.f32.mxu0 0.0
    %110 = vmatmul.mubr.f32.gmra.mxu0 %v37
    %v111 = vpop.f32.mrf.mxu0
    %v112 = vadd.f32 %v34, %v111
    %v113 = vpop.f32.mrf.mxu0
    %114 = vdwg.mxu0
    %v115 = vxor.u32 %v112, 2147483648
    %v116 = vmul.f32 %v115, 1.442695
    %v117 = vpow.pop %v116
    %v118 = vadd.f32 %v117, 1.0
    %v119 = vrcp.pop %v118
    %v120 = vmul.f32 1.0, %v119
    %vm121 = vcmask 122880
    %122 = vst.msk [vmem:[#allocation6] sm:$0x1] %vm121, %v120
    // Predicated region
    $region18: #{tpu_custom_call.1} parent=1 // pred_check
      _
    $region19: #{tpu_custom_call.1} parent=1 // pred_check_branch
      %124 = sbr.rel (0) target = $region21
    $region20: #{tpu_custom_call.1} parent=1 // pred_region
      %s126 = ssub.s32 16, 16
      %127 = vsyncadd [#allocation5], %s126
      %s129 = sshll.u32 [#allocation6], 4
      %s130 = int_to_ptr.vmem [resolvable:$true] %s129
      %132 = dma.vmem_to_hbm [thread:$0]  %s130, 16, %s3, [#allocation5]
    $region21: #{tpu_custom_call.1} parent=1 // pred_fallthru
      _
    // Predicated region
    $region22: #{tpu_custom_call.1} parent=1 // pred_check
      _
    $region23: #{tpu_custom_call.1} parent=1 // pred_check_branch
      %134 = sbr.rel (0) target = $region25
    $region24: #{tpu_custom_call.1} parent=1 // pred_region
      %135 = dma.done [#allocation5], 16
    $region25: #{tpu_custom_call.1} parent=1 // pred_fallthru
      _
    %136 = vsyncpa [#allocation4], 1
    %137 = vsyncpa [#allocation5], 1

</llo_original>
